<compile_context>
chip_gen: v5e
topology: v5e:2x2
jax: 0.10.0
libtpu: 0.0.40
codegen_flags: <defaults>
</compile_context>

<pallas_src>
import functools

import jax
import jax.numpy as jnp
from jax.experimental import pallas as pl
from jax.experimental.pallas import tpu as pltpu


def _ffn_kernel(x_ref, w13_ref, w2_ref, o_ref, acc_ref):
    """One (token-tile, hidden-tile) step of the SwiGLU FFN.

    grid = (num_token_tiles, num_hidden_tiles); the hidden axis is a
    reduction streamed through VMEM, accumulated in an f32 scratch tile.
    """
    j = pl.program_id(1)

    @pl.when(j == 0)
    def _init():
        acc_ref[...] = jnp.zeros_like(acc_ref)

    x = x_ref[...]                                              # (tm, D)   bf16
    w13 = w13_ref[0]                                            # (D, 2*th) bf16: [W1_cols | W3_cols]
    h = jnp.dot(x, w13, preferred_element_type=jnp.float32)     # (tm, 2*th) f32 — one fused MXU matmul
    th = h.shape[-1] // 2
    h1 = h[:, :th]
    h3 = h[:, th:]
    # SiLU: h1 * sigmoid(h1) = h1 / (1 + exp(-h1)).
    # exp + approximate reciprocal both go to the EUP slot (free while MXU busy).
    swish = h1 * pl.reciprocal(1.0 + jnp.exp(-h1), approx=True)
    gated = (swish * h3).astype(w2_ref.dtype)                   # (tm, th) bf16
    acc_ref[...] += jnp.dot(gated, w2_ref[...],
                            preferred_element_type=jnp.float32)  # (tm, D) f32

    @pl.when(j == pl.num_programs(1) - 1)
    def _finalize():
        o_ref[...] = acc_ref[...].astype(o_ref.dtype)


def _round_up(a, b):
    return -(-a // b) * b


def _pick_tile(total, target, granule=128):
    """Largest multiple of `granule` <= target that divides `total` (else total)."""
    t = min(target, total)
    t = (t // granule) * granule
    while t >= granule:
        if total % t == 0:
            return t
        t -= granule
    return total


@functools.partial(jax.jit, static_argnames=("token_tile", "hidden_tile"))
def feed_forward(x, w1, w3, w2, *, token_tile=256, hidden_tile=512):
    """SwiGLU FFN: (silu(x @ w1) * (x @ w3)) @ w2.

    x: (T, D); w1, w3: (D, H); w2: (H, D).  Returns (T, D) in x.dtype.
    """
    T, D = x.shape
    H = w1.shape[1]
    out_dtype = x.dtype
    assert D % 128 == 0, "model dim must be a multiple of 128"
    assert H % 128 == 0, "hidden dim must be a multiple of 128"

    # --- tile selection --------------------------------------------------
    tm = min(token_tile, _round_up(T, 16))     # bf16 sublane granularity = 16
    th = _pick_tile(H, hidden_tile)            # hidden-dim stream tile
    T_pad = _round_up(T, tm)
    nj = H // th

    # --- cast to bf16, pad tokens, pack W1||W3 per hidden tile -----------
    cd = jnp.bfloat16
    xb = x.astype(cd)
    if T_pad != T:
        xb = jnp.pad(xb, ((0, T_pad - T), (0, 0)))
    # TODO(synk): in production, pre-pack/cast the weights once outside the call.
    w1t = w1.astype(cd).reshape(D, nj, th).transpose(1, 0, 2)   # (nj, D, th)
    w3t = w3.astype(cd).reshape(D, nj, th).transpose(1, 0, 2)   # (nj, D, th)
    w13 = jnp.concatenate([w1t, w3t], axis=-1)                  # (nj, D, 2*th)
    w2b = w2.astype(cd)                                         # (H, D)

    grid = (T_pad // tm, nj)

    # Rough VMEM need (double-buffered streams + accumulator); raise the scoped
    # limit so large tiles are accepted, capped to stay v7x-safe (64 MiB phys).
    out_bytes = jnp.dtype(out_dtype).itemsize
    vmem_need = (
        2 * tm * D * 2              # x tiles (bf16, double buffered)
        + 2 * D * (2 * th) * 2      # fused W1||W3 tiles
        + 2 * th * D * 2            # W2 tiles
        + 2 * tm * D * out_bytes    # output tiles
        + tm * D * 4                # f32 accumulator
        + 4 * tm * (2 * th) * 4     # f32 intermediates headroom
    )
    vmem_limit = int(min(max(2 * vmem_need, 32 * 1024 * 1024), 96 * 1024 * 1024))

    out = pl.pallas_call(
        _ffn_kernel,
        out_shape=jax.ShapeDtypeStruct((T_pad, D), out_dtype),
        grid_spec=pltpu.PrefetchScalarGridSpec(
            num_scalar_prefetch=0,
            grid=grid,
            in_specs=[
                pl.BlockSpec((tm, D), lambda i, j: (i, 0)),            # x tile (resident over j)
                pl.BlockSpec((1, D, 2 * th), lambda i, j: (j, 0, 0)),  # W1||W3 hidden tile (streamed)
                pl.BlockSpec((th, D), lambda i, j: (j, 0)),            # W2 hidden tile (streamed)
            ],
            out_specs=pl.BlockSpec((tm, D), lambda i, j: (i, 0)),
            scratch_shapes=[pltpu.VMEM((tm, D), jnp.float32)],
        ),
        compiler_params=pltpu.CompilerParams(
            dimension_semantics=("parallel", "arbitrary"),
            vmem_limit_bytes=vmem_limit,
        ),
    )(xb, w13, w2b)

    return out[:T]


def _llama_hidden_dim(dim, multiple_of, ffn_dim_multiplier=None):
    hidden_dim = 4 * dim
    hidden_dim = int(2 * hidden_dim / 3)
    if ffn_dim_multiplier is not None:
        hidden_dim = int(ffn_dim_multiplier * hidden_dim)
    hidden_dim = multiple_of * ((hidden_dim + multiple_of - 1) // multiple_of)
    return hidden_dim


if __name__ == "__main__":
    # ModelArgs: dim=128, multiple_of=128, ffn_dim_multiplier=None
    dim = 128
    multiple_of = 128
    hidden_dim = _llama_hidden_dim(dim, multiple_of)   # -> 384

    batch, seq = 2, 8
    T = batch * seq

    key = jax.random.PRNGKey(0)
    kx, k1, k2, k3 = jax.random.split(key, 4)

    x = jax.random.normal(kx, (batch, seq, dim), dtype=jnp.float32)
    # Deterministic synthetic weights, stored as (in, out) — equivalent to
    # nn.Linear's x @ W.T with W of shape (out, in).
    w1 = jax.random.normal(k1, (dim, hidden_dim), dtype=jnp.float32) * (dim ** -0.5)
    w3 = jax.random.normal(k3, (dim, hidden_dim), dtype=jnp.float32) * (dim ** -0.5)
    w2 = jax.random.normal(k2, (hidden_dim, dim), dtype=jnp.float32) * (hidden_dim ** -0.5)

    x_flat = x.reshape(T, dim)
    out = feed_forward(x_flat, w1, w3, w2)
    out = out.reshape(batch, seq, dim)
    jax.block_until_ready(out)

    # Reference in plain JAX using the same bf16-input / f32-accumulate math.
    xb = x_flat.astype(jnp.bfloat16)
    w1b, w3b, w2b = (w.astype(jnp.bfloat16) for w in (w1, w3, w2))
    h1 = jnp.dot(xb, w1b, preferred_element_type=jnp.float32)
    h3 = jnp.dot(xb, w3b, preferred_element_type=jnp.float32)
    gated = (h1 * jax.nn.sigmoid(h1) * h3).astype(jnp.bfloat16)
    ref = jnp.dot(gated, w2b, preferred_element_type=jnp.float32).astype(x.dtype)
    ref = ref.reshape(batch, seq, dim)
    assert jnp.allclose(out, ref, atol=2e-2, rtol=5e-2), "mismatch vs bf16 reference"

    # Loose sanity check against the full-f32 reference too.
    h1f = x_flat @ w1
    ref_f32 = ((h1f * jax.nn.sigmoid(h1f)) * (x_flat @ w3)) @ w2
    ref_f32 = ref_f32.reshape(batch, seq, dim)
    assert jnp.allclose(out, ref_f32, atol=5e-2, rtol=1e-1), "mismatch vs f32 reference"

    print("KERNEL_OK")
</pallas_src>

<mosaic_0001>
module attributes {stable_mosaic.version = 11 : i64} {
  func.func @_ffn_kernel(%arg0: i32, %arg1: i32, %arg2: memref<16x128xbf16, #tpu.memory_space<vmem>>, %arg3: memref<1x128x768xbf16, #tpu.memory_space<vmem>>, %arg4: memref<384x128xbf16, #tpu.memory_space<vmem>>, %arg5: memref<16x128xf32, #tpu.memory_space<vmem>>, %arg6: memref<16x128xf32, #tpu.memory_space<vmem>>) attributes {dimension_semantics = [#tpu.dimension_semantics<parallel>, #tpu.dimension_semantics<arbitrary>], iteration_bounds = array<i64: 1, 1>, scalar_prefetch = 0 : i64, scratch_operands = 1 : i64, tpu.core_type = #tpu.core_type<tc>, window_params = [{transform_indices = @transform_0, window_bounds = array<i64: 16, 128>}, {transform_indices = @transform_1, window_bounds = array<i64: 1, 128, 768>}, {transform_indices = @transform_2, window_bounds = array<i64: 384, 128>}, {transform_indices = @transform_3, window_bounds = array<i64: 16, 128>}]} {
    %c0_i32 = arith.constant 0 : i32
    %0 = arith.cmpi eq, %arg1, %c0_i32 : i32
    %1 = arith.extui %0 : i1 to i32
    %c0_i32_0 = arith.constant 0 : i32
    %2 = arith.cmpi ne, %1, %c0_i32_0 : i32
    scf.if %2 {
      %cst_16 = arith.constant 0.000000e+00 : f32
      %26 = vector.broadcast %cst_16 : f32 to vector<16x128xf32>
      %c0_17 = arith.constant 0 : index
      %c0_18 = arith.constant 0 : index
      %27 = vector.load %arg6[%c0_17, %c0_18] : memref<16x128xf32, #tpu.memory_space<vmem>>, vector<16x128xf32>
      tpu.vector_store %arg6[%c0_17, %c0_18], %26 {strides = array<i32>} : memref<16x128xf32, #tpu.memory_space<vmem>>, vector<16x128xf32>,
    } else {
    }
    %c0 = arith.constant 0 : index
    %c0_1 = arith.constant 0 : index
    %3 = vector.load %arg2[%c0, %c0_1] : memref<16x128xbf16, #tpu.memory_space<vmem>>, vector<16x128xbf16>
    %c0_2 = arith.constant 0 : index
    %c0_3 = arith.constant 0 : index
    %c0_4 = arith.constant 0 : index
    %4 = vector.load %arg3[%c0_2, %c0_3, %c0_4] : memref<1x128x768xbf16, #tpu.memory_space<vmem>>, vector<1x128x768xbf16>
    %5 = vector.shape_cast %4 : vector<1x128x768xbf16> to vector<128x768xbf16>
    %cst = arith.constant dense<0.000000e+00> : vector<16x768xf32>
    %6 = tpu.matmul %3, %5, %cst {dimension_numbers = #tpu.dot_dimension_numbers<[1], [0], [0], [1], [0, 0, 1, 1], [], []>} : vector<16x128xbf16>, vector<128x768xbf16>, vector<16x768xf32> -> vector<16x768xf32>
    %7 = vector.extract_strided_slice %6 {offsets = [0, 0], sizes = [16, 384], strides = [1, 1]} : vector<16x768xf32> to vector<16x384xf32>
    %8 = vector.extract_strided_slice %6 {offsets = [0, 384], sizes = [16, 384], strides = [1, 1]} : vector<16x768xf32> to vector<16x384xf32>
    %cst_5 = arith.constant 0.000000e+00 : f32
    %9 = vector.broadcast %cst_5 : f32 to vector<16x384xf32>
    %10 = arith.subf %9, %7 : vector<16x384xf32>
    %11 = math.exp %10 : vector<16x384xf32>
    %cst_6 = arith.constant 1.000000e+00 : f32
    %12 = vector.broadcast %cst_6 : f32 to vector<16x384xf32>
    %13 = arith.addf %12, %11 : vector<16x384xf32>
    %14 = tpu.reciprocal %13 {approx = true} : vector<16x384xf32> -> vector<16x384xf32>
    %15 = arith.mulf %7, %14 : vector<16x384xf32>
    %16 = arith.mulf %15, %8 : vector<16x384xf32>
    %17 = arith.truncf %16 : vector<16x384xf32> to vector<16x384xbf16>
    %c0_7 = arith.constant 0 : index
    %c0_8 = arith.constant 0 : index
    %18 = vector.load %arg6[%c0_7, %c0_8] : memref<16x128xf32, #tpu.memory_space<vmem>>, vector<16x128xf32>
    %c0_9 = arith.constant 0 : index
    %c0_10 = arith.constant 0 : index
    %19 = vector.load %arg4[%c0_9, %c0_10] : memref<384x128xbf16, #tpu.memory_space<vmem>>, vector<384x128xbf16>
    %cst_11 = arith.constant dense<0.000000e+00> : vector<16x128xf32>
    %20 = tpu.matmul %17, %19, %cst_11 {dimension_numbers = #tpu.dot_dimension_numbers<[1], [0], [0], [1], [0, 0, 1, 1], [], []>} : vector<16x384xbf16>, vector<384x128xbf16>, vector<16x128xf32> -> vector<16x128xf32>
    %21 = arith.addf %18, %20 : vector<16x128xf32>
    %c0_12 = arith.constant 0 : index
    %c0_13 = arith.constant 0 : index
    %22 = vector.load %arg6[%c0_12, %c0_13] : memref<16x128xf32, #tpu.memory_space<vmem>>, vector<16x128xf32>
    tpu.vector_store %arg6[%c0_12, %c0_13], %21 {strides = array<i32>} : memref<16x128xf32, #tpu.memory_space<vmem>>, vector<16x128xf32>,
    %c0_i32_14 = arith.constant 0 : i32
    %23 = arith.cmpi eq, %arg1, %c0_i32_14 : i32
    %24 = arith.extui %23 : i1 to i32
    %c0_i32_15 = arith.constant 0 : i32
    %25 = arith.cmpi ne, %24, %c0_i32_15 : i32
    scf.if %25 {
      %c0_16 = arith.constant 0 : index
      %c0_17 = arith.constant 0 : index
      %26 = vector.load %arg6[%c0_16, %c0_17] : memref<16x128xf32, #tpu.memory_space<vmem>>, vector<16x128xf32>
      %c0_18 = arith.constant 0 : index
      %c0_19 = arith.constant 0 : index
      %27 = vector.load %arg5[%c0_18, %c0_19] : memref<16x128xf32, #tpu.memory_space<vmem>>, vector<16x128xf32>
      tpu.vector_store %arg5[%c0_18, %c0_19], %26 {strides = array<i32>} : memref<16x128xf32, #tpu.memory_space<vmem>>, vector<16x128xf32>,
    } else {
    }
    return
  }
  func.func @transform_0(%arg0: i32, %arg1: i32) -> (i32, i32) {
    %c0_i32 = arith.constant 0 : i32
    %c0_i32_0 = arith.constant 0 : i32
    return %arg0, %c0_i32 : i32, i32
  }
  func.func @transform_1(%arg0: i32, %arg1: i32) -> (i32, i32, i32) {
    %c0_i32 = arith.constant 0 : i32
    %c0_i32_0 = arith.constant 0 : i32
    %c0_i32_1 = arith.constant 0 : i32
    return %arg1, %c0_i32, %c0_i32_0 : i32, i32, i32
  }
  func.func @transform_2(%arg0: i32, %arg1: i32) -> (i32, i32) {
    %c0_i32 = arith.constant 0 : i32
    %c0_i32_0 = arith.constant 0 : i32
    return %arg1, %c0_i32 : i32, i32
  }
  func.func @transform_3(%arg0: i32, %arg1: i32) -> (i32, i32) {
    %c0_i32 = arith.constant 0 : i32
    %c0_i32_0 = arith.constant 0 : i32
    return %arg0, %c0_i32 : i32, i32
  }
}

</mosaic_0001>

<llo_original>
// kernel: feed_forward.1
$region0: #{feed_forward.1}
  #allocation0 [shape = 'u32[]', space=smem, size = 0x4, offset = 0x4, fixed_abs, tag = 'smem constant byte address 0x4 - core index']
  #allocation1 [shape = 'u32[72,128]{1,0:T(1,128)}', space=vmem, size = 0x9000, scoped, tag = 'internal scratch']
  #allocation2 [shape = 'f32[16,128]{1,0:T(8,128)}', space=vmem, size = 0x2000, scoped, tag = 'scratch operand']
  %s0 = inlined_call_operand.vmem [shape: bf16[16,128], index: 0, kind: input, shape index: {}]
  %s1 = inlined_call_operand.vmem [shape: bf16[1,128,768], index: 1, kind: input, shape index: {}]
  %s2 = inlined_call_operand.vmem [shape: bf16[384,128], index: 2, kind: input, shape index: {}]
  %s3 = inlined_call_operand.hbm [shape: f32[16,128], index: 3, kind: output, shape index: {}]
  %s4 = sld [smem:[#allocation0]]
  $region30: #{feed_forward.1} parent=0
    _
  %s6 = ssub.s32 1, %s4
  %s7 = scalar_select 0, %s6, %s4
  $region1: #{feed_forward.1} parent=0
    #allocation3 [shape = 'u8[8192]{0}', space=vmem, size = 0x2000, scoped, tag = 'output window, operand 0, single buffered']
    #allocation4 [shape = 's32[1]{0}', space=sflag, size = 0x4, scoped, tag = 'scoped memory for feed_forward.1']
    %8 = vsyncpa [#allocation4], 0
    // Predicated region
    $region2: #{feed_forward.1} parent=1 // pred_check
      _
    $region3: #{feed_forward.1} parent=1 // pred_check_branch
      %10 = sbr.rel (0) target = $region5
    $region4: #{feed_forward.1} parent=1 // pred_region
      _
    $region5: #{feed_forward.1} parent=1 // pred_fallthru
      _
    // Predicated region
    $region6: #{feed_forward.1} parent=1 // pred_check
      _
    $region7: #{feed_forward.1} parent=1 // pred_check_branch
      %12 = sbr.rel (0) target = $region9
    $region8: #{feed_forward.1} parent=1 // pred_region
      _
    $region9: #{feed_forward.1} parent=1 // pred_fallthru
      _
    // Predicated region
    $region10: #{feed_forward.1} parent=1 // pred_check
      _
    $region11: #{feed_forward.1} parent=1 // pred_check_branch
      %14 = sbr.rel (0) target = $region13
    $region12: #{feed_forward.1} parent=1 // pred_region
      _
    $region13: #{feed_forward.1} parent=1 // pred_fallthru
      _
    %p15 = scmp.eq.s32.totalorder 0, 0
    // Predicated region
    $region14: #{feed_forward.1} parent=1 // pred_check
      %p16 = pneg %p15
    $region15: #{feed_forward.1} parent=1 // pred_check_branch
      %18 = sbr.rel (%p16) target = $region17
    $region16: #{feed_forward.1} parent=1 // pred_region
      %19 = vst [vmem:[#allocation2] sm:$0xff] 0.0
      %20 = vst [vmem:[#allocation2 + $0x8] sm:$0xff] 0.0
    $region17: #{feed_forward.1} parent=1 // pred_fallthru
      _
    %v21 = vld [vmem:[%s0] sm:$0xf]
    %v22 = vld [vmem:[%s0 + $0x4] sm:$0xf]
    %v23 = vld [vmem:[%s1] sm:$0xff]
    %v24 = vld [vmem:[%s1 + $0x8] sm:$0xff]
    %v25 = vld [vmem:[%s1 + $0x10] sm:$0xff]
    %v26 = vld [vmem:[%s1 + $0x18] sm:$0xff]
    %v27 = vld [vmem:[%s1 + $0x20] sm:$0xff]
    %v28 = vld [vmem:[%s1 + $0x28] sm:$0xff]
    %v29 = vld [vmem:[%s1 + $0x30] sm:$0xff]
    %v30 = vld [vmem:[%s1 + $0x38] sm:$0xff]
    %v31 = vld [vmem:[%s1 + $0x40] sm:$0xff]
    %v32 = vld [vmem:[%s1 + $0x48] sm:$0xff]
    %v33 = vld [vmem:[%s1 + $0x50] sm:$0xff]
    %v34 = vld [vmem:[%s1 + $0x58] sm:$0xff]
    %v35 = vld [vmem:[%s1 + $0x60] sm:$0xff]
    %v36 = vld [vmem:[%s1 + $0x68] sm:$0xff]
    %v37 = vld [vmem:[%s1 + $0x70] sm:$0xff]
    %v38 = vld [vmem:[%s1 + $0x78] sm:$0xff]
    %v39 = vld [vmem:[%s1 + $0x80] sm:$0xff]
    %v40 = vld [vmem:[%s1 + $0x88] sm:$0xff]
    %v41 = vld [vmem:[%s1 + $0x90] sm:$0xff]
    %v42 = vld [vmem:[%s1 + $0x98] sm:$0xff]
    %v43 = vld [vmem:[%s1 + $0xa0] sm:$0xff]
    %v44 = vld [vmem:[%s1 + $0xa8] sm:$0xff]
    %v45 = vld [vmem:[%s1 + $0xb0] sm:$0xff]
    %v46 = vld [vmem:[%s1 + $0xb8] sm:$0xff]
    %v47 = vld [vmem:[%s1 + $0xc0] sm:$0xff]
    %v48 = vld [vmem:[%s1 + $0xc8] sm:$0xff]
    %v49 = vld [vmem:[%s1 + $0xd0] sm:$0xff]
    %v50 = vld [vmem:[%s1 + $0xd8] sm:$0xff]
    %v51 = vld [vmem:[%s1 + $0xe0] sm:$0xff]
    %v52 = vld [vmem:[%s1 + $0xe8] sm:$0xff]
    %v53 = vld [vmem:[%s1 + $0xf0] sm:$0xff]
    %v54 = vld [vmem:[%s1 + $0xf8] sm:$0xff]
    %v55 = vld [vmem:[%s1 + $0x100] sm:$0xff]
    %v56 = vld [vmem:[%s1 + $0x108] sm:$0xff]
    %v57 = vld [vmem:[%s1 + $0x110] sm:$0xff]
    %v58 = vld [vmem:[%s1 + $0x118] sm:$0xff]
    %v59 = vld [vmem:[%s1 + $0x120] sm:$0xff]
    %v60 = vld [vmem:[%s1 + $0x128] sm:$0xff]
    %v61 = vld [vmem:[%s1 + $0x130] sm:$0xff]
    %v62 = vld [vmem:[%s1 + $0x138] sm:$0xff]
    %v63 = vld [vmem:[%s1 + $0x140] sm:$0xff]
    %v64 = vld [vmem:[%s1 + $0x148] sm:$0xff]
    %v65 = vld [vmem:[%s1 + $0x150] sm:$0xff]
    %v66 = vld [vmem:[%s1 + $0x158] sm:$0xff]
    %v67 = vld [vmem:[%s1 + $0x160] sm:$0xff]
    %v68 = vld [vmem:[%s1 + $0x168] sm:$0xff]
    %v69 = vld [vmem:[%s1 + $0x170] sm:$0xff]
    %v70 = vld [vmem:[%s1 + $0x178] sm:$0xff]
    %v73 = vunpack.c.l.b16 %v21
    %v74 = vunpack.c.l.b16 %v22
    %v75 = vpack.c.b16 %v74, %v73
    %v125 = vunpack.c.l.b16 %v23
    %v126 = vunpack.c.h.b16 %v23
    %v127 = vunpack.c.l.b16 %v24
    %v128 = vunpack.c.h.b16 %v24
    %v129 = vunpack.c.l.b16 %v25
    %v130 = vunpack.c.h.b16 %v25
    %v131 = vunpack.c.l.b16 %v26
    %v132 = vunpack.c.h.b16 %v26
    %v133 = vunpack.c.l.b16 %v27
    %v134 = vunpack.c.h.b16 %v27
    %v135 = vunpack.c.l.b16 %v28
    %v136 = vunpack.c.h.b16 %v28
    %v137 = vunpack.c.l.b16 %v29
    %v138 = vunpack.c.h.b16 %v29
    %v139 = vunpack.c.l.b16 %v30
    %v140 = vunpack.c.h.b16 %v30
    %v141 = vunpack.c.l.b16 %v31
    %v142 = vunpack.c.h.b16 %v31
    %v143 = vunpack.c.l.b16 %v32
    %v144 = vunpack.c.h.b16 %v32
    %v145 = vunpack.c.l.b16 %v33
    %v146 = vunpack.c.h.b16 %v33
    %v147 = vunpack.c.l.b16 %v34
    %v148 = vunpack.c.h.b16 %v34
    %v149 = vunpack.c.l.b16 %v35
    %v150 = vunpack.c.h.b16 %v35
    %v151 = vunpack.c.l.b16 %v36
    %v152 = vunpack.c.h.b16 %v36
    %v153 = vunpack.c.l.b16 %v37
    %v154 = vunpack.c.h.b16 %v37
    %v155 = vunpack.c.l.b16 %v38
    %v156 = vunpack.c.h.b16 %v38
    %v157 = vunpack.c.l.b16 %v39
    %v158 = vunpack.c.h.b16 %v39
    %v159 = vunpack.c.l.b16 %v40
    %v160 = vunpack.c.h.b16 %v40
    %v161 = vunpack.c.l.b16 %v41
    %v162 = vunpack.c.h.b16 %v41
    %v163 = vunpack.c.l.b16 %v42
    %v164 = vunpack.c.h.b16 %v42
    %v165 = vunpack.c.l.b16 %v43
    %v166 = vunpack.c.h.b16 %v43
    %v167 = vunpack.c.l.b16 %v44
    %v168 = vunpack.c.h.b16 %v44
    %v169 = vunpack.c.l.b16 %v45
    %v170 = vunpack.c.h.b16 %v45
    %v171 = vunpack.c.l.b16 %v46
    %v172 = vunpack.c.h.b16 %v46
    %v173 = vunpack.c.l.b16 %v47
    %v174 = vunpack.c.h.b16 %v47
    %v175 = vunpack.c.l.b16 %v48
    %v176 = vunpack.c.h.b16 %v48
    %v177 = vunpack.c.l.b16 %v49
    %v178 = vunpack.c.h.b16 %v49
    %v179 = vunpack.c.l.b16 %v50
    %v180 = vunpack.c.h.b16 %v50
    %v181 = vunpack.c.l.b16 %v51
    %v182 = vunpack.c.h.b16 %v51
    %v183 = vunpack.c.l.b16 %v52
    %v184 = vunpack.c.h.b16 %v52
    %v185 = vunpack.c.l.b16 %v53
    %v186 = vunpack.c.h.b16 %v53
    %v187 = vunpack.c.l.b16 %v54
    %v188 = vunpack.c.h.b16 %v54
    %v189 = vunpack.c.l.b16 %v55
    %v190 = vunpack.c.h.b16 %v55
    %v191 = vunpack.c.l.b16 %v56
    %v192 = vunpack.c.h.b16 %v56
    %v193 = vunpack.c.l.b16 %v57
    %v194 = vunpack.c.h.b16 %v57
    %v195 = vunpack.c.l.b16 %v58
    %v196 = vunpack.c.h.b16 %v58
    %v197 = vunpack.c.l.b16 %v59
    %v198 = vunpack.c.h.b16 %v59
    %v199 = vunpack.c.l.b16 %v60
    %v200 = vunpack.c.h.b16 %v60
    %v201 = vunpack.c.l.b16 %v61
    %v202 = vunpack.c.h.b16 %v61
    %v203 = vunpack.c.l.b16 %v62
    %v204 = vunpack.c.h.b16 %v62
    %v205 = vunpack.c.l.b16 %v63
    %v206 = vunpack.c.h.b16 %v63
    %v207 = vunpack.c.l.b16 %v64
    %v208 = vunpack.c.h.b16 %v64
    %v209 = vunpack.c.l.b16 %v65
    %v210 = vunpack.c.h.b16 %v65
    %v211 = vunpack.c.l.b16 %v66
    %v212 = vunpack.c.h.b16 %v66
    %v213 = vunpack.c.l.b16 %v67
    %v214 = vunpack.c.h.b16 %v67
    %v215 = vunpack.c.l.b16 %v68
    %v216 = vunpack.c.h.b16 %v68
    %v217 = vunpack.c.l.b16 %v69
    %v218 = vunpack.c.h.b16 %v69
    %v219 = vunpack.c.l.b16 %v70
    %v220 = vunpack.c.h.b16 %v70
    %v221 = vpack.c.b16 %v131, %v125
    %v222 = vpack.c.b16 %v132, %v126
    %v223 = vpack.c.b16 %v133, %v127
    %v224 = vpack.c.b16 %v134, %v128
    %v225 = vpack.c.b16 %v135, %v129
    %v226 = vpack.c.b16 %v136, %v130
    %v227 = vpack.c.b16 %v143, %v137
    %v228 = vpack.c.b16 %v144, %v138
    %v229 = vpack.c.b16 %v145, %v139
    %v230 = vpack.c.b16 %v146, %v140
    %v231 = vpack.c.b16 %v147, %v141
    %v232 = vpack.c.b16 %v148, %v142
    %v233 = vpack.c.b16 %v155, %v149
    %v234 = vpack.c.b16 %v156, %v150
    %v235 = vpack.c.b16 %v157, %v151
    %v236 = vpack.c.b16 %v158, %v152
    %v237 = vpack.c.b16 %v159, %v153
    %v238 = vpack.c.b16 %v160, %v154
    %v239 = vpack.c.b16 %v167, %v161
    %v240 = vpack.c.b16 %v168, %v162
    %v241 = vpack.c.b16 %v169, %v163
    %v242 = vpack.c.b16 %v170, %v164
    %v243 = vpack.c.b16 %v171, %v165
    %v244 = vpack.c.b16 %v172, %v166
    %v245 = vpack.c.b16 %v179, %v173
    %v246 = vpack.c.b16 %v180, %v174
    %v247 = vpack.c.b16 %v181, %v175
    %v248 = vpack.c.b16 %v182, %v176
    %v249 = vpack.c.b16 %v183, %v177
    %v250 = vpack.c.b16 %v184, %v178
    %v251 = vpack.c.b16 %v191, %v185
    %v252 = vpack.c.b16 %v192, %v186
    %v253 = vpack.c.b16 %v193, %v187
    %v254 = vpack.c.b16 %v194, %v188
    %v255 = vpack.c.b16 %v195, %v189
    %v256 = vpack.c.b16 %v196, %v190
    %v257 = vpack.c.b16 %v203, %v197
    %v258 = vpack.c.b16 %v204, %v198
    %v259 = vpack.c.b16 %v205, %v199
    %v260 = vpack.c.b16 %v206, %v200
    %v261 = vpack.c.b16 %v207, %v201
    %v262 = vpack.c.b16 %v208, %v202
    %v263 = vpack.c.b16 %v215, %v209
    %v264 = vpack.c.b16 %v216, %v210
    %v265 = vpack.c.b16 %v217, %v211
    %v266 = vpack.c.b16 %v218, %v212
    %v267 = vpack.c.b16 %v219, %v213
    %v268 = vpack.c.b16 %v220, %v214
    %317 = vmatpush.bf16.msra.mxu0 %v263
    %318 = vmatpush.bf16.msra.mxu0 %v257
    %319 = vmatpush.bf16.msra.mxu0 %v251
    %320 = vmatpush.bf16.msra.mxu0 %v245
    %321 = vmatpush.bf16.msra.mxu0 %v239
    %322 = vmatpush.bf16.msra.mxu0 %v233
    %323 = vmatpush.bf16.msra.mxu0 %v227
    %324 = vmatpush.bf16.msra.mxu0 %v221
    %325 = vmatmul.bf16.gmra.mxu0 %v75
    %v326 = vpop.f32.mrf.mxu0
    %v327 = vadd.f32 0.0, %v326
    %v328 = vpop.f32.mrf.mxu0
    %v329 = vadd.f32 0.0, %v328
    %330 = vdwg.mxu0
    %331 = vmatpush.bf16.msra.mxu0 %v264
    %332 = vmatpush.bf16.msra.mxu0 %v258
    %333 = vmatpush.bf16.msra.mxu0 %v252
    %334 = vmatpush.bf16.msra.mxu0 %v246
    %335 = vmatpush.bf16.msra.mxu0 %v240
    %336 = vmatpush.bf16.msra.mxu0 %v234
    %337 = vmatpush.bf16.msra.mxu0 %v228
    %338 = vmatpush.bf16.msra.mxu0 %v222
    %339 = vmatmul.bf16.gmra.mxu0 %v75
    %v340 = vpop.f32.mrf.mxu0
    %v341 = vadd.f32 0.0, %v340
    %v342 = vpop.f32.mrf.mxu0
    %v343 = vadd.f32 0.0, %v342
    %344 = vdwg.mxu0
    %345 = vmatpush.bf16.msra.mxu0 %v265
    %346 = vmatpush.bf16.msra.mxu0 %v259
    %347 = vmatpush.bf16.msra.mxu0 %v253
    %348 = vmatpush.bf16.msra.mxu0 %v247
    %349 = vmatpush.bf16.msra.mxu0 %v241
    %350 = vmatpush.bf16.msra.mxu0 %v235
    %351 = vmatpush.bf16.msra.mxu0 %v229
    %352 = vmatpush.bf16.msra.mxu0 %v223
    %353 = vmatmul.bf16.gmra.mxu0 %v75
    %v354 = vpop.f32.mrf.mxu0
    %v355 = vadd.f32 0.0, %v354
    %v356 = vpop.f32.mrf.mxu0
    %v357 = vadd.f32 0.0, %v356
    %358 = vdwg.mxu0
    %359 = vmatpush.bf16.msra.mxu0 %v266
    %360 = vmatpush.bf16.msra.mxu0 %v260
    %361 = vmatpush.bf16.msra.mxu0 %v254
    %362 = vmatpush.bf16.msra.mxu0 %v248
    %363 = vmatpush.bf16.msra.mxu0 %v242
    %364 = vmatpush.bf16.msra.mxu0 %v236
    %365 = vmatpush.bf16.msra.mxu0 %v230
    %366 = vmatpush.bf16.msra.mxu0 %v224
    %367 = vmatmul.bf16.gmra.mxu0 %v75
    %v368 = vpop.f32.mrf.mxu0
    %v369 = vadd.f32 0.0, %v368
    %v370 = vpop.f32.mrf.mxu0
    %v371 = vadd.f32 0.0, %v370
    %372 = vdwg.mxu0
    %373 = vmatpush.bf16.msra.mxu0 %v267
    %374 = vmatpush.bf16.msra.mxu0 %v261
    %375 = vmatpush.bf16.msra.mxu0 %v255
    %376 = vmatpush.bf16.msra.mxu0 %v249
    %377 = vmatpush.bf16.msra.mxu0 %v243
    %378 = vmatpush.bf16.msra.mxu0 %v237
    %379 = vmatpush.bf16.msra.mxu0 %v231
    %380 = vmatpush.bf16.msra.mxu0 %v225
    %381 = vmatmul.bf16.gmra.mxu0 %v75
    %v382 = vpop.f32.mrf.mxu0
    %v383 = vadd.f32 0.0, %v382
    %v384 = vpop.f32.mrf.mxu0
    %v385 = vadd.f32 0.0, %v384
    %386 = vdwg.mxu0
    %387 = vmatpush.bf16.msra.mxu0 %v268
    %388 = vmatpush.bf16.msra.mxu0 %v262
    %389 = vmatpush.bf16.msra.mxu0 %v256
    %390 = vmatpush.bf16.msra.mxu0 %v250
    %391 = vmatpush.bf16.msra.mxu0 %v244
    %392 = vmatpush.bf16.msra.mxu0 %v238
    %393 = vmatpush.bf16.msra.mxu0 %v232
    %394 = vmatpush.bf16.msra.mxu0 %v226
    %395 = vmatmul.bf16.gmra.mxu0 %v75
    %v396 = vpop.f32.mrf.mxu0
    %v397 = vadd.f32 0.0, %v396
    %v398 = vpop.f32.mrf.mxu0
    %v399 = vadd.f32 0.0, %v398
    %400 = vdwg.mxu0
    %v401 = vsub.f32 0.0, %v327
    %v402 = vsub.f32 0.0, %v341
    %v403 = vsub.f32 0.0, %v355
    %v404 = vsub.f32 0.0, %v329
    %v405 = vsub.f32 0.0, %v343
    %v406 = vsub.f32 0.0, %v357
    %v407 = vmul.f32 %v401, 1.442695
    %v408 = vpow.pop %v407
    %v409 = vmul.f32 %v402, 1.442695
    %v410 = vpow.pop %v409
    %v411 = vmul.f32 %v403, 1.442695
    %v412 = vpow.pop %v411
    %v413 = vmul.f32 %v404, 1.442695
    %v414 = vpow.pop %v413
    %v415 = vmul.f32 %v405, 1.442695
    %v416 = vpow.pop %v415
    %v417 = vmul.f32 %v406, 1.442695
    %v418 = vpow.pop %v417
    %v419 = vadd.f32 %v408, 1.0
    %v420 = vadd.f32 %v410, 1.0
    %v421 = vadd.f32 %v412, 1.0
    %v422 = vadd.f32 %v414, 1.0
    %v423 = vadd.f32 %v416, 1.0
    %v424 = vadd.f32 %v418, 1.0
    %v425 = vrcp.pop %v419
    %v426 = vrcp.pop %v420
    %v427 = vrcp.pop %v421
    %v428 = vrcp.pop %v422
    %v429 = vrcp.pop %v423
    %v430 = vrcp.pop %v424
    %v431 = vmul.f32 %v327, %v425
    %v432 = vmul.f32 %v341, %v426
    %v433 = vmul.f32 %v355, %v427
    %v434 = vmul.f32 %v329, %v428
    %v435 = vmul.f32 %v343, %v429
    %v436 = vmul.f32 %v357, %v430
    %v437 = vmul.f32 %v431, %v369
    %v438 = vmul.f32 %v432, %v383
    %v439 = vmul.f32 %v433, %v397
    %v440 = vmul.f32 %v434, %v371
    %v441 = vmul.f32 %v435, %v385
    %v442 = vmul.f32 %v436, %v399
    %v443 = vpack.c.bf16 %v440, %v437
    %v444 = vpack.c.bf16 %v441, %v438
    %v445 = vpack.c.bf16 %v442, %v439
    %v446 = vld [vmem:[#allocation2] sm:$0xff]
    %v447 = vld [vmem:[#allocation2 + $0x8] sm:$0xff]
    %v448 = vld [vmem:[%s2] sm:$0xf]
    %v449 = vld [vmem:[%s2 + $0x4] sm:$0xf]
    %v450 = vld [vmem:[%s2 + $0x8] sm:$0xf]
    %v451 = vld [vmem:[%s2 + $0xc] sm:$0xf]
    %v452 = vld [vmem:[%s2 + $0x10] sm:$0xf]
    %v453 = vld [vmem:[%s2 + $0x14] sm:$0xf]
    %v454 = vld [vmem:[%s2 + $0x18] sm:$0xf]
    %v455 = vld [vmem:[%s2 + $0x1c] sm:$0xf]
    %v456 = vld [vmem:[%s2 + $0x20] sm:$0xf]
    %v457 = vld [vmem:[%s2 + $0x24] sm:$0xf]
    %v458 = vld [vmem:[%s2 + $0x28] sm:$0xf]
    %v459 = vld [vmem:[%s2 + $0x2c] sm:$0xf]
    %v460 = vld [vmem:[%s2 + $0x30] sm:$0xf]
    %v461 = vld [vmem:[%s2 + $0x34] sm:$0xf]
    %v462 = vld [vmem:[%s2 + $0x38] sm:$0xf]
    %v463 = vld [vmem:[%s2 + $0x3c] sm:$0xf]
    %v464 = vld [vmem:[%s2 + $0x40] sm:$0xf]
    %v465 = vld [vmem:[%s2 + $0x44] sm:$0xf]
    %v466 = vld [vmem:[%s2 + $0x48] sm:$0xf]
    %v467 = vld [vmem:[%s2 + $0x4c] sm:$0xf]
    %v468 = vld [vmem:[%s2 + $0x50] sm:$0xf]
    %v469 = vld [vmem:[%s2 + $0x54] sm:$0xf]
    %v470 = vld [vmem:[%s2 + $0x58] sm:$0xf]
    %v471 = vld [vmem:[%s2 + $0x5c] sm:$0xf]
    %v472 = vld [vmem:[%s2 + $0x60] sm:$0xf]
    %v473 = vld [vmem:[%s2 + $0x64] sm:$0xf]
    %v474 = vld [vmem:[%s2 + $0x68] sm:$0xf]
    %v475 = vld [vmem:[%s2 + $0x6c] sm:$0xf]
    %v476 = vld [vmem:[%s2 + $0x70] sm:$0xf]
    %v477 = vld [vmem:[%s2 + $0x74] sm:$0xf]
    %v478 = vld [vmem:[%s2 + $0x78] sm:$0xf]
    %v479 = vld [vmem:[%s2 + $0x7c] sm:$0xf]
    %v480 = vld [vmem:[%s2 + $0x80] sm:$0xf]
    %v481 = vld [vmem:[%s2 + $0x84] sm:$0xf]
    %v482 = vld [vmem:[%s2 + $0x88] sm:$0xf]
    %v483 = vld [vmem:[%s2 + $0x8c] sm:$0xf]
    %v484 = vld [vmem:[%s2 + $0x90] sm:$0xf]
    %v485 = vld [vmem:[%s2 + $0x94] sm:$0xf]
    %v486 = vld [vmem:[%s2 + $0x98] sm:$0xf]
    %v487 = vld [vmem:[%s2 + $0x9c] sm:$0xf]
    %v488 = vld [vmem:[%s2 + $0xa0] sm:$0xf]
    %v489 = vld [vmem:[%s2 + $0xa4] sm:$0xf]
    %v490 = vld [vmem:[%s2 + $0xa8] sm:$0xf]
    %v491 = vld [vmem:[%s2 + $0xac] sm:$0xf]
    %v492 = vld [vmem:[%s2 + $0xb0] sm:$0xf]
    %v493 = vld [vmem:[%s2 + $0xb4] sm:$0xf]
    %v494 = vld [vmem:[%s2 + $0xb8] sm:$0xf]
    %v495 = vld [vmem:[%s2 + $0xbc] sm:$0xf]
    %v544 = vunpack.c.l.b16 %v448
    %v545 = vunpack.c.l.b16 %v449
    %v546 = vunpack.c.l.b16 %v450
    %v547 = vunpack.c.l.b16 %v451
    %v548 = vunpack.c.l.b16 %v452
    %v549 = vunpack.c.l.b16 %v453
    %v550 = vunpack.c.l.b16 %v454
    %v551 = vunpack.c.l.b16 %v455
    %v552 = vunpack.c.l.b16 %v456
    %v553 = vunpack.c.l.b16 %v457
    %v554 = vunpack.c.l.b16 %v458
    %v555 = vunpack.c.l.b16 %v459
    %v556 = vunpack.c.l.b16 %v460
    %v557 = vunpack.c.l.b16 %v461
    %v558 = vunpack.c.l.b16 %v462
    %v559 = vunpack.c.l.b16 %v463
    %v560 = vunpack.c.l.b16 %v464
    %v561 = vunpack.c.l.b16 %v465
    %v562 = vunpack.c.l.b16 %v466
    %v563 = vunpack.c.l.b16 %v467
    %v564 = vunpack.c.l.b16 %v468
    %v565 = vunpack.c.l.b16 %v469
    %v566 = vunpack.c.l.b16 %v470
    %v567 = vunpack.c.l.b16 %v471
    %v568 = vunpack.c.l.b16 %v472
    %v569 = vunpack.c.l.b16 %v473
    %v570 = vunpack.c.l.b16 %v474
    %v571 = vunpack.c.l.b16 %v475
    %v572 = vunpack.c.l.b16 %v476
    %v573 = vunpack.c.l.b16 %v477
    %v574 = vunpack.c.l.b16 %v478
    %v575 = vunpack.c.l.b16 %v479
    %v576 = vunpack.c.l.b16 %v480
    %v577 = vunpack.c.l.b16 %v481
    %v578 = vunpack.c.l.b16 %v482
    %v579 = vunpack.c.l.b16 %v483
    %v580 = vunpack.c.l.b16 %v484
    %v581 = vunpack.c.l.b16 %v485
    %v582 = vunpack.c.l.b16 %v486
    %v583 = vunpack.c.l.b16 %v487
    %v584 = vunpack.c.l.b16 %v488
    %v585 = vunpack.c.l.b16 %v489
    %v586 = vunpack.c.l.b16 %v490
    %v587 = vunpack.c.l.b16 %v491
    %v588 = vunpack.c.l.b16 %v492
    %v589 = vunpack.c.l.b16 %v493
    %v590 = vunpack.c.l.b16 %v494
    %v591 = vunpack.c.l.b16 %v495
    %v592 = vpack.c.b16 %v545, %v544
    %v593 = vpack.c.b16 %v547, %v546
    %v594 = vpack.c.b16 %v549, %v548
    %v595 = vpack.c.b16 %v551, %v550
    %v596 = vpack.c.b16 %v553, %v552
    %v597 = vpack.c.b16 %v555, %v554
    %v598 = vpack.c.b16 %v557, %v556
    %v599 = vpack.c.b16 %v559, %v558
    %v600 = vpack.c.b16 %v561, %v560
    %v601 = vpack.c.b16 %v563, %v562
    %v602 = vpack.c.b16 %v565, %v564
    %v603 = vpack.c.b16 %v567, %v566
    %v604 = vpack.c.b16 %v569, %v568
    %v605 = vpack.c.b16 %v571, %v570
    %v606 = vpack.c.b16 %v573, %v572
    %v607 = vpack.c.b16 %v575, %v574
    %v608 = vpack.c.b16 %v577, %v576
    %v609 = vpack.c.b16 %v579, %v578
    %v610 = vpack.c.b16 %v581, %v580
    %v611 = vpack.c.b16 %v583, %v582
    %v612 = vpack.c.b16 %v585, %v584
    %v613 = vpack.c.b16 %v587, %v586
    %v614 = vpack.c.b16 %v589, %v588
    %v615 = vpack.c.b16 %v591, %v590
    %640 = vmatpush.bf16.msra.mxu0 %v599
    %641 = vmatpush.bf16.msra.mxu0 %v598
    %642 = vmatpush.bf16.msra.mxu0 %v597
    %643 = vmatpush.bf16.msra.mxu0 %v596
    %644 = vmatpush.bf16.msra.mxu0 %v595
    %645 = vmatpush.bf16.msra.mxu0 %v594
    %646 = vmatpush.bf16.msra.mxu0 %v593
    %647 = vmatpush.bf16.msra.mxu0 %v592
    %648 = vmatmul.bf16.gmra.mxu0 %v443
    %v649 = vpop.f32.mrf.mxu0
    %v650 = vadd.f32 0.0, %v649
    %v651 = vpop.f32.mrf.mxu0
    %v652 = vadd.f32 0.0, %v651
    %653 = vdwg.mxu0
    %654 = vmatpush.bf16.msra.mxu0 %v607
    %655 = vmatpush.bf16.msra.mxu0 %v606
    %656 = vmatpush.bf16.msra.mxu0 %v605
    %657 = vmatpush.bf16.msra.mxu0 %v604
    %658 = vmatpush.bf16.msra.mxu0 %v603
    %659 = vmatpush.bf16.msra.mxu0 %v602
    %660 = vmatpush.bf16.msra.mxu0 %v601
    %661 = vmatpush.bf16.msra.mxu0 %v600
    %662 = vmatmul.bf16.gmra.mxu0 %v444
    %v663 = vpop.f32.mrf.mxu0
    %v664 = vadd.f32 %v650, %v663
    %v665 = vpop.f32.mrf.mxu0
    %v666 = vadd.f32 %v652, %v665
    %667 = vdwg.mxu0
    %668 = vmatpush.bf16.msra.mxu0 %v615
    %669 = vmatpush.bf16.msra.mxu0 %v614
    %670 = vmatpush.bf16.msra.mxu0 %v613
    %671 = vmatpush.bf16.msra.mxu0 %v612
    %672 = vmatpush.bf16.msra.mxu0 %v611
    %673 = vmatpush.bf16.msra.mxu0 %v610
    %674 = vmatpush.bf16.msra.mxu0 %v609
    %675 = vmatpush.bf16.msra.mxu0 %v608
    %676 = vmatmul.bf16.gmra.mxu0 %v445
    %v677 = vpop.f32.mrf.mxu0
    %v678 = vadd.f32 %v664, %v677
    %v679 = vpop.f32.mrf.mxu0
    %v680 = vadd.f32 %v666, %v679
    %681 = vdwg.mxu0
    %v682 = vadd.f32 %v446, %v678
    %v683 = vadd.f32 %v447, %v680
    %684 = vst [vmem:[#allocation2] sm:$0xff] %v682
    %685 = vst [vmem:[#allocation2 + $0x8] sm:$0xff] %v683
    // Predicated region
    $region18: #{feed_forward.1} parent=1 // pred_check
      %p686 = pneg %p15
    $region19: #{feed_forward.1} parent=1 // pred_check_branch
      %688 = sbr.rel (%p686) target = $region21
    $region20: #{feed_forward.1} parent=1 // pred_region
      %v689 = vld [vmem:[#allocation2] sm:$0xff]
      %v690 = vld [vmem:[#allocation2 + $0x8] sm:$0xff]
      %691 = vst [vmem:[#allocation3] sm:$0xff] %v689
      %692 = vst [vmem:[#allocation3 + $0x8] sm:$0xff] %v690
    $region21: #{feed_forward.1} parent=1 // pred_fallthru
      _
    // Predicated region
    $region22: #{feed_forward.1} parent=1 // pred_check
      _
    $region23: #{feed_forward.1} parent=1 // pred_check_branch
      %694 = sbr.rel (0) target = $region25
    $region24: #{feed_forward.1} parent=1 // pred_region
      %696 = vsyncadd [#allocation4], 0
      %s697 = sshll.u32 [#allocation3], 4
      %s698 = int_to_ptr.vmem [resolvable:$true] %s697
      %s699 = sshll.u32 %s3, 4
      %s700 = int_to_ptr.hbm [resolvable:$true] %s699
      %705 = dma.vmem_to_hbm [thread:$0]  %s698, 256, %s700, [#allocation4], 128, 128, 8
    $region25: #{feed_forward.1} parent=1 // pred_fallthru
      _
    // Predicated region
    $region26: #{feed_forward.1} parent=1 // pred_check
      _
    $region27: #{feed_forward.1} parent=1 // pred_check_branch
      %707 = sbr.rel (0) target = $region29
    $region28: #{feed_forward.1} parent=1 // pred_region
      %709 = dma.done [#allocation4], 256
    $region29: #{feed_forward.1} parent=1 // pred_fallthru
      _
    %710 = vsyncpa [#allocation4], 1

</llo_original>
